<compile_context>
chip_gen: v7x
topology: tpu7x:2x2x1
jax: 0.10.0
libtpu: 0.0.40
codegen_flags: <defaults>
</compile_context>

<pallas_src>
import functools

import jax
import jax.numpy as jnp
from jax.experimental import pallas as pl
from jax.experimental.pallas import tpu as pltpu


def _round_up(n, m):
    return ((n + m - 1) // m) * m


def dueling_dqn_kernel(num_actions, x_ref, w1_ref, b1_ref, wh_ref, bh_ref,
                       q_ref):
    # x_ref : [TB, D]   f32 flattened input tile (cast to bf16 in-kernel)
    # w1_ref: [D, H]    bf16 first-layer weight (VMEM-resident)
    # b1_ref: [1, H]    f32 first-layer bias (resident)
    # wh_ref: [H, HP]   bf16 fused head weight: cols [0,A)=advantage, col A=value,
    #                   remaining columns are exactly zero (resident)
    # bh_ref: [1, HP]   f32 fused head bias, same column layout, zero padding
    # q_ref : [TB, A]   f32 output tile (only the advantage columns are stored)
    A = num_actions

    # In-kernel bf16 cast of the activation (VALU has huge slack here); avoids
    # a separate wrapper-side cast pass over x in HBM.
    x = x_ref[...].astype(jnp.bfloat16)

    # feature = ReLU(x @ W1 + b1) -- bf16 MXU matmul, f32 accumulate.
    h = jnp.dot(x, w1_ref[...], preferred_element_type=jnp.float32)
    h = jnp.maximum(h + b1_ref[...], 0.0)

    # Fused heads: one lane-dense bf16 matmul, f32 accumulate, f32 bias.
    heads = jnp.dot(h.astype(jnp.bfloat16), wh_ref[...],
                    preferred_element_type=jnp.float32)
    heads = heads + bh_ref[...]

    # Padded head columns have zero weight AND zero bias, so the full-width
    # row sum equals v + sum(adv); the advantage mean divides by A only.
    v = heads[:, A:A + 1]                                   # [TB, 1]
    row_sum = jnp.sum(heads, axis=1, keepdims=True)         # v + sum(adv)
    a_mean = (row_sum - v) * (1.0 / float(A))               # mean over A only

    # q = v + (a - mean(a)); store only the A advantage columns.  The masked
    # vst this produces is irrelevant -- the store slot has enormous slack.
    q_ref[...] = (v + heads[:, :A] - a_mean).astype(q_ref.dtype)


def dueling_dqn_forward(x, packed_params, num_actions, *, block_b=4096):
    """x: [B, C, H, W] (NCHW, like the torch module). Returns q: [B, num_actions]."""
    w1, b1, wh, bh = packed_params
    B = x.shape[0]
    D, H = w1.shape
    HP = wh.shape[1]
    A = num_actions

    # nn.Flatten(): contiguous reshape (no copy); keep f32, cast in-kernel.
    x_flat = x.reshape(B, -1).astype(jnp.float32)
    assert x_flat.shape[1] == D

    # Batch tiling: big tiles amortize the ~0.35us grid-step overhead, but
    # expose >= 2 grid steps whenever possible so v7x can shard the "parallel"
    # axis across both TensorCores.
    TB = min(block_b, _round_up(B, 8))
    if B > 8:
        TB = min(TB, _round_up((B + 1) // 2, 8))
    TB = max(8, _round_up(TB, 8))
    B_pad = _round_up(B, TB)
    if B_pad != B:
        # Only needed when B is not a tile multiple; padded rows are garbage
        # and get sliced off below.
        x_flat = jnp.pad(x_flat, ((0, B_pad - B), (0, 0)))

    num_steps = B_pad // TB
    grid = (num_steps,)

    # Compute per step is tiny, so deepen the x pipeline when the grid is long
    # enough to benefit (costs only TB*D*4 extra VMEM bytes).
    if num_steps >= 3:
        x_spec = pl.BlockSpec((TB, D), lambda i: (i, 0),
                              pipeline_mode=pl.Buffered(3))
    else:
        x_spec = pl.BlockSpec((TB, D), lambda i: (i, 0))

    q_pad = pl.pallas_call(
        functools.partial(dueling_dqn_kernel, num_actions),
        out_shape=jax.ShapeDtypeStruct((B_pad, A), jnp.float32),
        grid=grid,
        in_specs=[
            x_spec,                                    # x: tiled over batch
            pl.BlockSpec((D, H), lambda i: (0, 0)),    # W1: resident
            pl.BlockSpec((1, H), lambda i: (0, 0)),    # b1: resident
            pl.BlockSpec((H, HP), lambda i: (0, 0)),   # fused head W: resident
            pl.BlockSpec((1, HP), lambda i: (0, 0)),   # fused head b: resident
        ],
        # Narrow output block: last dim == full array dim (A), so it's legal.
        out_specs=pl.BlockSpec((TB, A), lambda i: (i, 0)),
        compiler_params=pltpu.CompilerParams(
            dimension_semantics=("parallel",),
        ),
    )(x_flat, w1, b1, wh, bh)

    return q_pad if B_pad == B else q_pad[:B]


def init_params(key, input_dim, output_dim, hidden_dim=128):
    """Deterministic init mimicking torch.nn.Linear (U[-1/sqrt(fan_in), +]).

    Weights are stored as [in_features, out_features] (transpose of torch
    layout) so the kernel can do x @ W directly.
    """
    k1, k2, k3, k4, k5, k6 = jax.random.split(key, 6)

    def uni(k, shape, fan_in):
        bound = 1.0 / jnp.sqrt(float(fan_in))
        return jax.random.uniform(k, shape, jnp.float32, -bound, bound)

    w1 = uni(k1, (input_dim, hidden_dim), input_dim)
    b1 = uni(k2, (1, hidden_dim), input_dim)
    wv = uni(k3, (hidden_dim, 1), hidden_dim)
    bv = uni(k4, (1, 1), hidden_dim)
    wa = uni(k5, (hidden_dim, output_dim), hidden_dim)
    ba = uni(k6, (1, output_dim), hidden_dim)
    return (w1, b1, wv, bv, wa, ba)


def pack_params(params, num_actions):
    """Fuse value/advantage heads into one lane-dense [H, HP] weight + bias.

    Column layout: cols [0, A) = advantage, col A = value, the rest MUST be
    exactly zero in BOTH weight and bias -- the in-kernel advantage mean relies
    on the 128-wide row sum equalling v + sum(adv).
    W1 and the fused head weight are stored bf16 (one-time cast); biases f32.
    """
    w1, b1, wv, bv, wa, ba = params
    hidden_dim = w1.shape[1]
    A = num_actions
    HP = _round_up(A + 1, 128)

    wh = jnp.zeros((hidden_dim, HP), jnp.float32)
    wh = wh.at[:, :A].set(wa)
    wh = wh.at[:, A:A + 1].set(wv)

    bh = jnp.zeros((1, HP), jnp.float32)
    bh = bh.at[:, :A].set(ba)
    bh = bh.at[:, A:A + 1].set(bv)

    return (w1.astype(jnp.bfloat16), b1, wh.astype(jnp.bfloat16), bh)


def reference_forward(x, params):
    """Pure-JAX f32 reference matching the torch forward exactly."""
    w1, b1, wv, bv, wa, ba = params
    xf = x.reshape(x.shape[0], -1).astype(jnp.float32)
    h = jnp.maximum(xf @ w1 + b1, 0.0)
    v = h @ wv + bv
    a = h @ wa + ba
    return v + (a - a.mean(axis=1, keepdims=True))


if __name__ == "__main__":
    key = jax.random.PRNGKey(0)
    kx, kp = jax.random.split(key)

    # Small shapes consistent with the module: x is NCHW, flattened to input_dim.
    B, C, Hs, Ws = 8, 4, 4, 4
    input_dim = C * Hs * Ws        # 64
    hidden_dim = 128
    output_dim = 8

    x = jax.random.normal(kx, (B, C, Hs, Ws), jnp.float32)
    params = init_params(kp, input_dim, output_dim, hidden_dim)
    packed = pack_params(params, output_dim)

    q = dueling_dqn_forward(x, packed, output_dim)
    q = jax.block_until_ready(q)

    q_ref = reference_forward(x, params)
    assert q.shape == (B, output_dim), q.shape
    # Both matmuls now run in bf16 (f32 accumulate) -> slightly looser tolerance.
    assert jnp.allclose(q, q_ref, atol=5e-2, rtol=5e-2), (
        "mismatch vs JAX reference, max abs err = "
        f"{float(jnp.max(jnp.abs(q - q_ref)))}")

    print("KERNEL_OK")
</pallas_src>

<mosaic_0001>
module attributes {stable_mosaic.version = 11 : i64} {
  func.func @dueling_dqn_kernel(%arg0: i32, %arg1: memref<8x64xf32, #tpu.memory_space<vmem>>, %arg2: memref<64x128xbf16, #tpu.memory_space<vmem>>, %arg3: memref<1x128xf32, #tpu.memory_space<vmem>>, %arg4: memref<128x128xbf16, #tpu.memory_space<vmem>>, %arg5: memref<1x128xf32, #tpu.memory_space<vmem>>, %arg6: memref<8x8xf32, #tpu.memory_space<vmem>>) attributes {dimension_semantics = [#tpu.dimension_semantics<parallel>], iteration_bounds = array<i64: 1>, scalar_prefetch = 0 : i64, scratch_operands = 0 : i64, tpu.core_type = #tpu.core_type<tc>, window_params = [{transform_indices = @transform_0, window_bounds = array<i64: 8, 64>}, {pipeline_mode = #tpu.pipeline_mode<synchronous>, transform_indices = @transform_1, window_bounds = array<i64: 64, 128>}, {pipeline_mode = #tpu.pipeline_mode<synchronous>, transform_indices = @transform_2, window_bounds = array<i64: 1, 128>}, {pipeline_mode = #tpu.pipeline_mode<synchronous>, transform_indices = @transform_3, window_bounds = array<i64: 128, 128>}, {pipeline_mode = #tpu.pipeline_mode<synchronous>, transform_indices = @transform_4, window_bounds = array<i64: 1, 128>}, {transform_indices = @transform_5, window_bounds = array<i64: 8, 8>}]} {
    %c0 = arith.constant 0 : index
    %c0_0 = arith.constant 0 : index
    %0 = vector.load %arg1[%c0, %c0_0] : memref<8x64xf32, #tpu.memory_space<vmem>>, vector<8x64xf32>
    %1 = arith.truncf %0 : vector<8x64xf32> to vector<8x64xbf16>
    %c0_1 = arith.constant 0 : index
    %c0_2 = arith.constant 0 : index
    %2 = vector.load %arg2[%c0_1, %c0_2] : memref<64x128xbf16, #tpu.memory_space<vmem>>, vector<64x128xbf16>
    %cst = arith.constant dense<0.000000e+00> : vector<8x128xf32>
    %3 = tpu.matmul %1, %2, %cst {dimension_numbers = #tpu.dot_dimension_numbers<[1], [0], [0], [1], [0, 0, 1, 1], [], []>} : vector<8x64xbf16>, vector<64x128xbf16>, vector<8x128xf32> -> vector<8x128xf32>
    %c0_3 = arith.constant 0 : index
    %c0_4 = arith.constant 0 : index
    %4 = vector.load %arg3[%c0_3, %c0_4] : memref<1x128xf32, #tpu.memory_space<vmem>>, vector<1x128xf32>
    %5 = vector.broadcast %4 : vector<1x128xf32> to vector<8x128xf32>
    %6 = arith.addf %3, %5 : vector<8x128xf32>
    %cst_5 = arith.constant 0.000000e+00 : f32
    %7 = vector.broadcast %cst_5 : f32 to vector<8x128xf32>
    %8 = arith.maximumf %6, %7 : vector<8x128xf32>
    %9 = arith.truncf %8 : vector<8x128xf32> to vector<8x128xbf16>
    %c0_6 = arith.constant 0 : index
    %c0_7 = arith.constant 0 : index
    %10 = vector.load %arg4[%c0_6, %c0_7] : memref<128x128xbf16, #tpu.memory_space<vmem>>, vector<128x128xbf16>
    %cst_8 = arith.constant dense<0.000000e+00> : vector<8x128xf32>
    %11 = tpu.matmul %9, %10, %cst_8 {dimension_numbers = #tpu.dot_dimension_numbers<[1], [0], [0], [1], [0, 0, 1, 1], [], []>} : vector<8x128xbf16>, vector<128x128xbf16>, vector<8x128xf32> -> vector<8x128xf32>
    %c0_9 = arith.constant 0 : index
    %c0_10 = arith.constant 0 : index
    %12 = vector.load %arg5[%c0_9, %c0_10] : memref<1x128xf32, #tpu.memory_space<vmem>>, vector<1x128xf32>
    %13 = vector.broadcast %12 : vector<1x128xf32> to vector<8x128xf32>
    %14 = arith.addf %11, %13 : vector<8x128xf32>
    %15 = vector.extract_strided_slice %14 {offsets = [0, 8], sizes = [8, 1], strides = [1, 1]} : vector<8x128xf32> to vector<8x1xf32>
    %cst_11 = arith.constant dense<0.000000e+00> : vector<8xf32>
    %16 = vector.multi_reduction <add>, %14, %cst_11 [1] : vector<8x128xf32> to vector<8xf32>
    %17 = vector.shape_cast %16 : vector<8xf32> to vector<8x1xf32>
    %18 = arith.subf %17, %15 : vector<8x1xf32>
    %cst_12 = arith.constant 1.250000e-01 : f32
    %19 = vector.broadcast %cst_12 : f32 to vector<8x1xf32>
    %20 = arith.mulf %18, %19 : vector<8x1xf32>
    %21 = vector.extract_strided_slice %14 {offsets = [0, 0], sizes = [8, 8], strides = [1, 1]} : vector<8x128xf32> to vector<8x8xf32>
    %22 = vector.broadcast %15 : vector<8x1xf32> to vector<8x8xf32>
    %23 = arith.addf %22, %21 : vector<8x8xf32>
    %24 = vector.broadcast %20 : vector<8x1xf32> to vector<8x8xf32>
    %25 = arith.subf %23, %24 : vector<8x8xf32>
    %c0_13 = arith.constant 0 : index
    %c0_14 = arith.constant 0 : index
    %26 = vector.load %arg6[%c0_13, %c0_14] : memref<8x8xf32, #tpu.memory_space<vmem>>, vector<8x8xf32>
    tpu.vector_store %arg6[%c0_13, %c0_14], %25 {strides = array<i32>} : memref<8x8xf32, #tpu.memory_space<vmem>>, vector<8x8xf32>,
    return
  }
  func.func @transform_0(%arg0: i32) -> (i32, i32) {
    %c0_i32 = arith.constant 0 : i32
    %c0_i32_0 = arith.constant 0 : i32
    return %arg0, %c0_i32 : i32, i32
  }
  func.func @transform_1(%arg0: i32) -> (i32, i32) {
    %c0_i32 = arith.constant 0 : i32
    %c0_i32_0 = arith.constant 0 : i32
    %c0_i32_1 = arith.constant 0 : i32
    return %c0_i32, %c0_i32_0 : i32, i32
  }
  func.func @transform_2(%arg0: i32) -> (i32, i32) {
    %c0_i32 = arith.constant 0 : i32
    %c0_i32_0 = arith.constant 0 : i32
    %c0_i32_1 = arith.constant 0 : i32
    return %c0_i32, %c0_i32_0 : i32, i32
  }
  func.func @transform_3(%arg0: i32) -> (i32, i32) {
    %c0_i32 = arith.constant 0 : i32
    %c0_i32_0 = arith.constant 0 : i32
    %c0_i32_1 = arith.constant 0 : i32
    return %c0_i32, %c0_i32_0 : i32, i32
  }
  func.func @transform_4(%arg0: i32) -> (i32, i32) {
    %c0_i32 = arith.constant 0 : i32
    %c0_i32_0 = arith.constant 0 : i32
    %c0_i32_1 = arith.constant 0 : i32
    return %c0_i32, %c0_i32_0 : i32, i32
  }
  func.func @transform_5(%arg0: i32) -> (i32, i32) {
    %c0_i32 = arith.constant 0 : i32
    %c0_i32_0 = arith.constant 0 : i32
    return %arg0, %c0_i32 : i32, i32
  }
}

</mosaic_0001>

<llo_original>
// kernel: tpu_custom_call.1
$region0: #{tpu_custom_call.1}
  #allocation0 [shape = 'u32[]', space=smem, size = 0x4, offset = 0x4, fixed_abs, tag = 'smem constant byte address 0x4 - core index']
  #allocation1 [shape = 'u32[144,128]{1,0:T(1,128)}', space=vmem, size = 0x12000, scoped, tag = 'internal scratch']
  %s0 = inlined_call_operand.hbm [shape: f32[8,64], index: 0, kind: input, shape index: {}]
  %s1 = inlined_call_operand.hbm [shape: bf16[64,128], index: 1, kind: input, shape index: {}]
  %s2 = inlined_call_operand.vmem [shape: f32[1,128], index: 2, kind: input, shape index: {}]
  %s3 = inlined_call_operand.hbm [shape: bf16[128,128], index: 3, kind: input, shape index: {}]
  %s4 = inlined_call_operand.vmem [shape: f32[1,128], index: 4, kind: input, shape index: {}]
  %s5 = inlined_call_operand.hbm [shape: f32[8,8], index: 5, kind: output, shape index: {}]
  %s6 = sld [smem:[#allocation0]]
  $region42: #{tpu_custom_call.1} parent=0
    _
  %s8 = ssub.s32 1, %s6
  %s9 = scalar_select 0, %s8, %s6
  $region1: #{tpu_custom_call.1} parent=0
    #allocation2 [shape = 'u8[4096]{0}', space=vmem, size = 0x1000, scoped, tag = 'input window, operand 0, single buffered']
    #allocation3 [shape = 's32[1]{0}', space=sflag, size = 0x4, scoped, tag = 'scoped memory for tpu_custom_call.1']
    #allocation4 [shape = 's32[1]{0}', space=sflag, size = 0x4, scoped, tag = 'scoped memory for tpu_custom_call.1']
    #allocation5 [shape = 'u8[16384]{0}', space=vmem, size = 0x4000, scoped, tag = 'input window, operand 1, single buffered']
    #allocation6 [shape = 's32[1]{0}', space=sflag, size = 0x4, scoped, tag = 'scoped memory for tpu_custom_call.1']
    #allocation7 [shape = 'u8[32768]{0}', space=vmem, size = 0x8000, scoped, tag = 'input window, operand 3, single buffered']
    #allocation8 [shape = 'u8[4096]{0}', space=vmem, size = 0x1000, scoped, tag = 'output window, operand 0, single buffered']
    %10 = vsyncpa [#allocation3], 0
    %11 = vsyncpa [#allocation6], 0
    %12 = vsyncpa [#allocation4], 0
    // Predicated region
    $region2: #{tpu_custom_call.1} parent=1 // pred_check
      _
    $region3: #{tpu_custom_call.1} parent=1 // pred_check_branch
      %14 = sbr.rel (0) target = $region5
    $region4: #{tpu_custom_call.1} parent=1 // pred_region
      %s16 = ssub.s32 128, 128
      %17 = vsyncadd [#allocation3], %s16
      %s19 = sshll.u32 [#allocation2], 4
      %s20 = int_to_ptr.vmem [resolvable:$true] %s19
      %22 = dma.hbm_to_vmem [thread:$0]  %s0, 128, %s20, [#allocation3]
    $region5: #{tpu_custom_call.1} parent=1 // pred_fallthru
      _
    // Predicated region
    $region6: #{tpu_custom_call.1} parent=1 // pred_check
      _
    $region7: #{tpu_custom_call.1} parent=1 // pred_check_branch
      %24 = sbr.rel (0) target = $region9
    $region8: #{tpu_custom_call.1} parent=1 // pred_region
      %s26 = ssub.s32 512, 512
      %27 = vsyncadd [#allocation6], %s26
      %s28 = sshll.u32 [#allocation5], 4
      %s29 = int_to_ptr.vmem [resolvable:$true] %s28
      %34 = dma.hbm_to_vmem [thread:$0]  %s1, 512, %s29, [#allocation6], 64, 64, 4
    $region9: #{tpu_custom_call.1} parent=1 // pred_fallthru
      _
    // Predicated region
    $region10: #{tpu_custom_call.1} parent=1 // pred_check
      _
    $region11: #{tpu_custom_call.1} parent=1 // pred_check_branch
      %36 = sbr.rel (0) target = $region13
    $region12: #{tpu_custom_call.1} parent=1 // pred_region
      _
    $region13: #{tpu_custom_call.1} parent=1 // pred_fallthru
      _
    // Predicated region
    $region14: #{tpu_custom_call.1} parent=1 // pred_check
      _
    $region15: #{tpu_custom_call.1} parent=1 // pred_check_branch
      %38 = sbr.rel (0) target = $region17
    $region16: #{tpu_custom_call.1} parent=1 // pred_region
      %s40 = ssub.s32 1024, 1024
      %41 = vsyncadd [#allocation6], %s40
      %s42 = sshll.u32 [#allocation7], 4
      %s43 = int_to_ptr.vmem [resolvable:$true] %s42
      %48 = dma.hbm_to_vmem [thread:$0]  %s3, 1024, %s43, [#allocation6], 64, 64, 4
    $region17: #{tpu_custom_call.1} parent=1 // pred_fallthru
      _
    // Predicated region
    $region18: #{tpu_custom_call.1} parent=1 // pred_check
      _
    $region19: #{tpu_custom_call.1} parent=1 // pred_check_branch
      %50 = sbr.rel (0) target = $region21
    $region20: #{tpu_custom_call.1} parent=1 // pred_region
      _
    $region21: #{tpu_custom_call.1} parent=1 // pred_fallthru
      _
    // Predicated region
    $region22: #{tpu_custom_call.1} parent=1 // pred_check
      _
    $region23: #{tpu_custom_call.1} parent=1 // pred_check_branch
      %52 = sbr.rel (0) target = $region25
    $region24: #{tpu_custom_call.1} parent=1 // pred_region
      %53 = dma.done [#allocation3], 128
    $region25: #{tpu_custom_call.1} parent=1 // pred_fallthru
      _
    // Predicated region
    $region26: #{tpu_custom_call.1} parent=1 // pred_check
      _
    $region27: #{tpu_custom_call.1} parent=1 // pred_check_branch
      %55 = sbr.rel (0) target = $region29
    $region28: #{tpu_custom_call.1} parent=1 // pred_region
      %56 = dma.done [#allocation6], 512
    $region29: #{tpu_custom_call.1} parent=1 // pred_fallthru
      _
    // Predicated region
    $region30: #{tpu_custom_call.1} parent=1 // pred_check
      _
    $region31: #{tpu_custom_call.1} parent=1 // pred_check_branch
      %58 = sbr.rel (0) target = $region33
    $region32: #{tpu_custom_call.1} parent=1 // pred_region
      %59 = dma.done [#allocation6], 1024
    $region33: #{tpu_custom_call.1} parent=1 // pred_fallthru
      _
    %v61 = vld [vmem:[#allocation2] sm:$0xff]
    %v62 = vpack.c.bf16 %v61, %v61
    %v63 = vld [vmem:[#allocation5] sm:$0xf]
    %v64 = vld [vmem:[#allocation5 + $0x4] sm:$0xf]
    %v65 = vld [vmem:[#allocation5 + $0x8] sm:$0xf]
    %v66 = vld [vmem:[#allocation5 + $0xc] sm:$0xf]
    %v67 = vld [vmem:[#allocation5 + $0x10] sm:$0xf]
    %v68 = vld [vmem:[#allocation5 + $0x14] sm:$0xf]
    %v69 = vld [vmem:[#allocation5 + $0x18] sm:$0xf]
    %v70 = vld [vmem:[#allocation5 + $0x1c] sm:$0xf]
    %v71 = vld [vmem:[%s2] sm:$0x1]
    %v73 = vlaneseq
    %v74 = vshrl.u32 %v73, 7
    %v75 = vsub.s32 0, %v74
    %v76 = vrot.slane %v71, %v75
    %v86 = vunpack.c.l.b16 %v63
    %v87 = vunpack.c.l.b16 %v64
    %v88 = vunpack.c.l.b16 %v65
    %v89 = vunpack.c.l.b16 %v66
    %v90 = vunpack.c.l.b16 %v67
    %v91 = vunpack.c.l.b16 %v68
    %v92 = vunpack.c.l.b16 %v69
    %v93 = vunpack.c.l.b16 %v70
    %v94 = vpack.c.b16 %v87, %v86
    %v95 = vpack.c.b16 %v89, %v88
    %v96 = vpack.c.b16 %v91, %v90
    %v97 = vpack.c.b16 %v93, %v92
    %vm102 = vcmask 523264
    %v104 = vsel %vm102, %v62, 0
    %106 = vmatprep.subr.bf16.mxu0 0
    %107 = vmatpush1.bf16.msra.mxu0 %v94
    %108 = vmatprep.subr.bf16.mxu0 0
    %109 = vmatpush1.bf16.msra.mxu0 %v95
    %110 = vmatprep.subr.bf16.mxu0 0
    %111 = vmatpush1.bf16.msra.mxu0 %v96
    %112 = vmatprep.subr.bf16.mxu0 0
    %113 = vmatpush1.bf16.msra.mxu0 %v97
    %114 = vmatprep.subr.bf16.mxu0 0
    %115 = vmatpush1.bf16.msra.mxu0 0
    %116 = vmatprep.subr.bf16.mxu0 0
    %117 = vmatpush1.bf16.msra.mxu0 0
    %118 = vmatprep.subr.bf16.mxu0 0
    %119 = vmatpush1.bf16.msra.mxu0 0
    %120 = vmatprep.subr.bf16.mxu0 0
    %121 = vmatpush1.bf16.msra.mxu0 0
    %122 = vmatprep.subr.bf16.mxu0 0
    %123 = vmatpush1.bf16.msra.mxu0 0
    %124 = vmatprep.subr.bf16.mxu0 0
    %125 = vmatpush1.bf16.msra.mxu0 0
    %126 = vmatprep.subr.bf16.mxu0 0
    %127 = vmatpush1.bf16.msra.mxu0 0
    %128 = vmatprep.subr.bf16.mxu0 0
    %129 = vmatpush1.bf16.msra.mxu0 0
    %130 = vmatprep.subr.bf16.mxu0 0
    %131 = vmatpush1.bf16.msra.mxu0 0
    %132 = vmatprep.subr.bf16.mxu0 0
    %133 = vmatpush1.bf16.msra.mxu0 0
    %134 = vmatprep.subr.bf16.mxu0 0
    %135 = vmatpush1.bf16.msra.mxu0 0
    %136 = vmatprep.subr.bf16.mxu0 0
    %137 = vmatpush1.bf16.msra.mxu0 0
    %138 = vmatprep.mubr.bf16.mxu0 0
    %139 = vmatmul.mubr.bf16.gmra.mrb[0].mxu0 %v104
    %v140 = vpop.f32.mrb[0].mxu0
    %v141 = vadd.f32 %v76, %v140
    %v142 = vpop.f32.mrb[0].mxu0
    %v143 = vpop.f32.mrb[0].mxu0
    %v144 = vpop.f32.mrb[0].mxu0
    %145 = vdwg.mxu0
    %v146 = vmax.f32 %v141, 0.0
    %v147 = vpack.c.bf16 %v146, %v146
    %v148 = vld [vmem:[#allocation7] sm:$0xf]
    %v149 = vld [vmem:[#allocation7 + $0x4] sm:$0xf]
    %v150 = vld [vmem:[#allocation7 + $0x8] sm:$0xf]
    %v151 = vld [vmem:[#allocation7 + $0xc] sm:$0xf]
    %v152 = vld [vmem:[#allocation7 + $0x10] sm:$0xf]
    %v153 = vld [vmem:[#allocation7 + $0x14] sm:$0xf]
    %v154 = vld [vmem:[#allocation7 + $0x18] sm:$0xf]
    %v155 = vld [vmem:[#allocation7 + $0x1c] sm:$0xf]
    %v156 = vld [vmem:[#allocation7 + $0x20] sm:$0xf]
    %v157 = vld [vmem:[#allocation7 + $0x24] sm:$0xf]
    %v158 = vld [vmem:[#allocation7 + $0x28] sm:$0xf]
    %v159 = vld [vmem:[#allocation7 + $0x2c] sm:$0xf]
    %v160 = vld [vmem:[#allocation7 + $0x30] sm:$0xf]
    %v161 = vld [vmem:[#allocation7 + $0x34] sm:$0xf]
    %v162 = vld [vmem:[#allocation7 + $0x38] sm:$0xf]
    %v163 = vld [vmem:[#allocation7 + $0x3c] sm:$0xf]
    %v164 = vld [vmem:[%s4] sm:$0x1]
    %v166 = vlaneseq
    %v167 = vshrl.u32 %v166, 7
    %v168 = vsub.s32 0, %v167
    %v169 = vrot.slane %v164, %v168
    %v187 = vunpack.c.l.b16 %v148
    %v188 = vunpack.c.l.b16 %v149
    %v189 = vunpack.c.l.b16 %v150
    %v190 = vunpack.c.l.b16 %v151
    %v191 = vunpack.c.l.b16 %v152
    %v192 = vunpack.c.l.b16 %v153
    %v193 = vunpack.c.l.b16 %v154
    %v194 = vunpack.c.l.b16 %v155
    %v195 = vunpack.c.l.b16 %v156
    %v196 = vunpack.c.l.b16 %v157
    %v197 = vunpack.c.l.b16 %v158
    %v198 = vunpack.c.l.b16 %v159
    %v199 = vunpack.c.l.b16 %v160
    %v200 = vunpack.c.l.b16 %v161
    %v201 = vunpack.c.l.b16 %v162
    %v202 = vunpack.c.l.b16 %v163
    %v203 = vpack.c.b16 %v188, %v187
    %v204 = vpack.c.b16 %v190, %v189
    %v205 = vpack.c.b16 %v192, %v191
    %v206 = vpack.c.b16 %v194, %v193
    %v207 = vpack.c.b16 %v196, %v195
    %v208 = vpack.c.b16 %v198, %v197
    %v209 = vpack.c.b16 %v200, %v199
    %v210 = vpack.c.b16 %v202, %v201
    %219 = vmatprep.subr.bf16.mxu0 0
    %220 = vmatpush1.bf16.msra.mxu0 %v203
    %221 = vmatprep.subr.bf16.mxu0 0
    %222 = vmatpush1.bf16.msra.mxu0 %v204
    %223 = vmatprep.subr.bf16.mxu0 0
    %224 = vmatpush1.bf16.msra.mxu0 %v205
    %225 = vmatprep.subr.bf16.mxu0 0
    %226 = vmatpush1.bf16.msra.mxu0 %v206
    %227 = vmatprep.subr.bf16.mxu0 0
    %228 = vmatpush1.bf16.msra.mxu0 %v207
    %229 = vmatprep.subr.bf16.mxu0 0
    %230 = vmatpush1.bf16.msra.mxu0 %v208
    %231 = vmatprep.subr.bf16.mxu0 0
    %232 = vmatpush1.bf16.msra.mxu0 %v209
    %233 = vmatprep.subr.bf16.mxu0 0
    %234 = vmatpush1.bf16.msra.mxu0 %v210
    %235 = vmatprep.subr.bf16.mxu0 0
    %236 = vmatpush1.bf16.msra.mxu0 0
    %237 = vmatprep.subr.bf16.mxu0 0
    %238 = vmatpush1.bf16.msra.mxu0 0
    %239 = vmatprep.subr.bf16.mxu0 0
    %240 = vmatpush1.bf16.msra.mxu0 0
    %241 = vmatprep.subr.bf16.mxu0 0
    %242 = vmatpush1.bf16.msra.mxu0 0
    %243 = vmatprep.subr.bf16.mxu0 0
    %244 = vmatpush1.bf16.msra.mxu0 0
    %245 = vmatprep.subr.bf16.mxu0 0
    %246 = vmatpush1.bf16.msra.mxu0 0
    %247 = vmatprep.subr.bf16.mxu0 0
    %248 = vmatpush1.bf16.msra.mxu0 0
    %249 = vmatprep.subr.bf16.mxu0 0
    %250 = vmatpush1.bf16.msra.mxu0 0
    %251 = vmatprep.mubr.bf16.mxu0 0
    %252 = vmatmul.mubr.bf16.gmra.mrb[0].mxu0 %v147
    %v253 = vpop.f32.mrb[0].mxu0
    %v254 = vadd.f32 %v169, %v253
    %v255 = vpop.f32.mrb[0].mxu0
    %v256 = vpop.f32.mrb[0].mxu0
    %v257 = vpop.f32.mrb[0].mxu0
    %258 = vdwg.mxu0
    %259 = vadd.xlane.f32.xlu0 %v254
    %v260 = vpop.xlane.xlu0 %259
    %v261 = vsub.f32 %v260, %v254
    %v262 = vmul.f32 %v261, 0.125
    %264 = vset.pattern.permute.xlu0 8
    %265 = vperm.xlu0 %264, %v254
    %v266 = vpop.permute.xlu0 %265
    %v268 = vadd.f32 %v266, %v254
    %270 = vset.pattern.permute.xlu0 8
    %271 = vperm.xlu0 %270, %v262
    %v272 = vpop.permute.xlu0 %271
    %v274 = vsub.f32 %v268, %v272
    %vm275 = vcmask 64512
    %276 = vst.msk [vmem:[#allocation8] sm:$0xff] %vm275, %v274
    // Predicated region
    $region34: #{tpu_custom_call.1} parent=1 // pred_check
      _
    $region35: #{tpu_custom_call.1} parent=1 // pred_check_branch
      %278 = sbr.rel (0) target = $region37
    $region36: #{tpu_custom_call.1} parent=1 // pred_region
      %s280 = ssub.s32 128, 128
      %281 = vsyncadd [#allocation4], %s280
      %s283 = sshll.u32 [#allocation8], 4
      %s284 = int_to_ptr.vmem [resolvable:$true] %s283
      %286 = dma.vmem_to_hbm [thread:$0]  %s284, 128, %s5, [#allocation4]
    $region37: #{tpu_custom_call.1} parent=1 // pred_fallthru
      _
    // Predicated region
    $region38: #{tpu_custom_call.1} parent=1 // pred_check
      _
    $region39: #{tpu_custom_call.1} parent=1 // pred_check_branch
      %288 = sbr.rel (0) target = $region41
    $region40: #{tpu_custom_call.1} parent=1 // pred_region
      %289 = dma.done [#allocation4], 128
    $region41: #{tpu_custom_call.1} parent=1 // pred_fallthru
      _
    %290 = vsyncpa [#allocation3], 1
    %291 = vsyncpa [#allocation6], 1
    %292 = vsyncpa [#allocation4], 1

</llo_original>
